<compile_context>
chip_gen: v6e
topology: v6e:2x2x1
jax: 0.10.0
libtpu: 0.0.40
codegen_flags: <defaults>
</compile_context>

<pallas_src>
import functools

import jax
import jax.numpy as jnp
from jax import lax
from jax.experimental import pallas as pl
from jax.experimental.pallas import tpu as pltpu

EPS = 1e-5
LANE = 128
VMEM_LIMIT_BYTES = 64 * 1024 * 1024   # fits v7x's 64 MiB, < v5e/v6e 128 MiB


def _round_up(x, m):
    return ((x + m - 1) // m) * m


def _pick_tm(m, max_tile):
    """Largest divisor of m that is a multiple of 8 (sublane) and <= max_tile."""
    best = None
    t = 8
    while t <= min(m, max_tile):
        if m % t == 0:
            best = t
        t += 8
    return best if best is not None else m


def _cparams(n_axes):
    return pltpu.CompilerParams(
        dimension_semantics=("parallel",) * n_axes,
        vmem_limit_bytes=VMEM_LIMIT_BYTES)


# ----------------------------- kernels ---------------------------------------

def _conv1x1_stage_kernel(*refs, apply_bn_relu, cdt):
    """[optional BN+ReLU of input] -> 1x1 conv (MXU) -> partial BN stats."""
    if apply_bn_relu:
        x_ref, s_ref, t_ref, w_ref, y_ref, stats_ref = refs
        h = jnp.maximum(x_ref[...].astype(jnp.float32) * s_ref[...] + t_ref[...],
                        0.0).astype(cdt)
    else:
        x_ref, w_ref, y_ref, stats_ref = refs
        h = x_ref[...].astype(cdt)
    y = jnp.dot(h, w_ref[...], preferred_element_type=jnp.float32)   # (TM, Cout_p)
    su = jnp.sum(y, axis=0, keepdims=True)                           # (1, Cout_p)
    sq = jnp.sum(y * y, axis=0, keepdims=True)
    stats_ref[...] = jnp.concatenate([su, sq], axis=0)[None]         # (1, 2, Cout_p)
    y_ref[...] = y.astype(y_ref.dtype)


def _conv3x3_stage_kernel(y1_ref, s_ref, t_ref, w2_ref, y2_ref, stats_ref,
                          halo_ref, strip_ref, *, h, w):
    """BN1+ReLU -> 3x3 conv (padding=1) as ONE large-K matmul -> partial stats."""
    cp = y1_ref.shape[-1]
    hw = h * w
    w_halo = halo_ref.shape[1]
    hdt = halo_ref.dtype

    # BN + ReLU in f32, cast once at the store into the halo interior.
    y1 = y1_ref[...].astype(jnp.float32)                              # (1, h, w, cp)
    s = s_ref[...].reshape(1, 1, 1, cp)
    t = t_ref[...].reshape(1, 1, 1, cp)
    h1 = jnp.maximum(y1 * s + t, 0.0).astype(hdt)
    halo_ref[1:h + 1, 1:w + 1, :] = h1.reshape(h, w, cp)

    # Zero only the border slabs the 3x3 taps actually read (rows 0 and h+1,
    # cols 0 and w+1); columns beyond w+1 (sublane padding) are never read.
    halo_ref[0:1, :, :] = jnp.zeros((1, w_halo, cp), hdt)
    halo_ref[h + 1:h + 2, :, :] = jnp.zeros((1, w_halo, cp), hdt)
    halo_ref[:, 0:1, :] = jnp.zeros((h + 2, 1, cp), hdt)
    halo_ref[:, w + 1:w + 2, :] = jnp.zeros((h + 2, 1, cp), hdt)

    # im2col strip (hw, 9*cp): each tap lands on a lane-aligned column slab.
    for kh in range(3):
        for kw in range(3):
            tap = kh * 3 + kw
            strip_ref[:, tap * cp:(tap + 1) * cp] = (
                halo_ref[kh:kh + h, kw:kw + w, :].reshape(hw, cp))

    # Single K = 9*cp matmul (fills the 256-wide MXU on v6e/v7x).
    y2 = jnp.dot(strip_ref[...], w2_ref[...], preferred_element_type=jnp.float32)
    su = jnp.sum(y2, axis=0, keepdims=True)
    sq = jnp.sum(y2 * y2, axis=0, keepdims=True)
    stats_ref[...] = jnp.concatenate([su, sq], axis=0)[None]
    y2_ref[...] = y2.reshape(1, h, w, cp).astype(y2_ref.dtype)


def _residual_out_kernel(y3_ref, x_ref, s_ref, t_ref, out_ref):
    """BN3 scale/shift + identity residual + ReLU (all f32 in-register)."""
    y3 = y3_ref[...].astype(jnp.float32)
    xr = x_ref[...].astype(jnp.float32)
    out_ref[...] = jnp.maximum(y3 * s_ref[...] + t_ref[...] + xr, 0.0
                               ).astype(out_ref.dtype)


# ----------------------------- pass wrappers ----------------------------------

def _run_conv1x1_stage(x2d, w, *, scale=None, shift=None, apply_bn_relu,
                       out_dtype, cdt, tm):
    m, cin_p = x2d.shape
    cout_p = w.shape[1]
    nt = m // tm
    kernel = functools.partial(_conv1x1_stage_kernel,
                               apply_bn_relu=apply_bn_relu, cdt=cdt)
    in_specs = [pl.BlockSpec((tm, cin_p), lambda i: (i, 0))]
    args = [x2d]
    if apply_bn_relu:
        in_specs += [pl.BlockSpec((1, cin_p), lambda i: (0, 0)),
                     pl.BlockSpec((1, cin_p), lambda i: (0, 0))]
        args += [scale, shift]
    in_specs.append(pl.BlockSpec((cin_p, cout_p), lambda i: (0, 0)))
    args.append(w)

    y, st = pl.pallas_call(
        kernel,
        out_shape=(jax.ShapeDtypeStruct((m, cout_p), out_dtype),
                   jax.ShapeDtypeStruct((nt, 2, cout_p), jnp.float32)),
        grid=(nt,),
        in_specs=in_specs,
        out_specs=(pl.BlockSpec((tm, cout_p), lambda i: (i, 0)),
                   pl.BlockSpec((1, 2, cout_p), lambda i: (i, 0, 0))),
        compiler_params=_cparams(1),
    )(*args)
    return y, st


def _run_conv3x3_stage(y1_4d, scale, shift, w2_big, *, out_dtype, cdt):
    n, h, w, cp = y1_4d.shape
    w_halo = _round_up(w + 2, 8)          # sublane-aligned halo width
    kernel = functools.partial(_conv3x3_stage_kernel, h=h, w=w)

    y2, st = pl.pallas_call(
        kernel,
        out_shape=(jax.ShapeDtypeStruct((n, h, w, cp), out_dtype),
                   jax.ShapeDtypeStruct((n, 2, cp), jnp.float32)),
        grid=(n,),
        in_specs=[pl.BlockSpec((1, h, w, cp), lambda i: (i, 0, 0, 0)),
                  pl.BlockSpec((1, cp), lambda i: (0, 0)),
                  pl.BlockSpec((1, cp), lambda i: (0, 0)),
                  pl.BlockSpec((9 * cp, cp), lambda i: (0, 0))],
        out_specs=(pl.BlockSpec((1, h, w, cp), lambda i: (i, 0, 0, 0)),
                   pl.BlockSpec((1, 2, cp), lambda i: (i, 0, 0))),
        scratch_shapes=[pltpu.VMEM((h + 2, w_halo, cp), cdt),      # halo
                        pltpu.VMEM((h * w, 9 * cp), cdt)],         # im2col strip
        compiler_params=_cparams(1),
    )(y1_4d, scale, shift, w2_big)
    return y2, st


def _run_residual_out(y3_2d, x2d, scale, shift, *, out_dtype, tm):
    m, cp = y3_2d.shape
    nt = m // tm
    return pl.pallas_call(
        _residual_out_kernel,
        out_shape=jax.ShapeDtypeStruct((m, cp), out_dtype),
        grid=(nt,),
        in_specs=[pl.BlockSpec((tm, cp), lambda i: (i, 0)),
                  pl.BlockSpec((tm, cp), lambda i: (i, 0)),
                  pl.BlockSpec((1, cp), lambda i: (0, 0)),
                  pl.BlockSpec((1, cp), lambda i: (0, 0))],
        out_specs=pl.BlockSpec((tm, cp), lambda i: (i, 0)),
        compiler_params=_cparams(1),
    )(y3_2d, x2d, scale, shift)


# -------------------------- host-side BN finalize ----------------------------

def _bn_scale_shift(partial, gamma_p, beta_p, count, eps=EPS):
    """Combine per-tile (sum, sum_sq) partials into per-channel scale/shift."""
    s = jnp.sum(partial[:, 0, :], axis=0)
    ss = jnp.sum(partial[:, 1, :], axis=0)
    mean = s / count
    var = jnp.maximum(ss / count - mean * mean, 0.0)   # biased, BN train mode
    scale = gamma_p[0] * lax.rsqrt(var + eps)
    shift = beta_p[0] - mean * scale
    return scale.reshape(1, -1), shift.reshape(1, -1)


# ------------------------------ params / prep ---------------------------------

def init_bottleneck_params(key, inplanes, planes, base_width=64, groups=1):
    width = int(planes * (base_width / 64.0)) * groups
    cout = planes * 4                                    # expansion = 4
    ks = jax.random.split(key, 9)
    params = {
        "w1": jax.random.normal(ks[0], (width, inplanes, 1, 1), jnp.float32) * 0.1,
        "g1": 1.0 + 0.1 * jax.random.normal(ks[3], (width,), jnp.float32),
        "b1": 0.1 * jax.random.normal(ks[4], (width,), jnp.float32),
        "w2": jax.random.normal(ks[1], (width, width, 3, 3), jnp.float32) * 0.1,
        "g2": 1.0 + 0.1 * jax.random.normal(ks[5], (width,), jnp.float32),
        "b2": 0.1 * jax.random.normal(ks[6], (width,), jnp.float32),
        "w3": jax.random.normal(ks[2], (cout, width, 1, 1), jnp.float32) * 0.1,
        "g3": 1.0 + 0.1 * jax.random.normal(ks[7], (cout,), jnp.float32),
        "b3": 0.1 * jax.random.normal(ks[8], (cout,), jnp.float32),
    }
    return params, width, cout


def prepare_bottleneck_params(params, compute_dtype=jnp.bfloat16, io_dtype=None):
    """One-time prep: reshape / transpose / lane-pad / cast weights & BN affine."""
    if io_dtype is None:
        io_dtype = compute_dtype
    w1, w2, w3 = params["w1"], params["w2"], params["w3"]
    width, cin = w1.shape[0], w1.shape[1]
    cout = w3.shape[0]
    cin_p, wd_p, co_p = (_round_up(cin, LANE), _round_up(width, LANE),
                         _round_up(cout, LANE))

    w1_2d = jnp.transpose(w1[:, :, 0, 0], (1, 0))                       # (cin, width)
    w3_2d = jnp.transpose(w3[:, :, 0, 0], (1, 0))                       # (width, cout)
    w2_taps = jnp.transpose(w2, (2, 3, 1, 0)).reshape(9, width, width)  # (tap,in,out)

    def pad2(a, rows, cols):
        return jnp.zeros((rows, cols), compute_dtype).at[
            :a.shape[0], :a.shape[1]].set(a.astype(compute_dtype))

    w1p = pad2(w1_2d, cin_p, wd_p)
    w3p = pad2(w3_2d, wd_p, co_p)
    # Big-K layout for the 3x3: (9*wd_p, wd_p), row = tap*wd_p + cin.
    w2p = jnp.zeros((9, wd_p, wd_p), compute_dtype).at[
        :, :width, :width].set(w2_taps.astype(compute_dtype)).reshape(9 * wd_p, wd_p)

    def pad_gb(g, b, cp):
        gp = jnp.ones((1, cp), jnp.float32).at[0, :g.shape[0]].set(g.astype(jnp.float32))
        bp = jnp.zeros((1, cp), jnp.float32).at[0, :b.shape[0]].set(b.astype(jnp.float32))
        return gp, bp

    g1, b1 = pad_gb(params["g1"], params["b1"], wd_p)
    g2, b2 = pad_gb(params["g2"], params["b2"], wd_p)
    g3, b3 = pad_gb(params["g3"], params["b3"], co_p)

    return {"w1": w1p, "g1": g1, "b1": b1,
            "w2": w2p, "g2": g2, "b2": b2,
            "w3": w3p, "g3": g3, "b3": b3,
            "cin": cin, "width": width, "cout": cout,
            "cin_p": cin_p, "wd_p": wd_p, "co_p": co_p,
            "compute_dtype": compute_dtype, "io_dtype": io_dtype}


# ------------------------------ forward ---------------------------------------

def bottleneck_forward(x_nchw, prep, *, tm=1024, stride=1, dilation=1):
    assert stride == 1 and dilation == 1  # TODO(synk): general stride/dilation
    n, cin, h, w = x_nchw.shape
    cin_p, wd_p, co_p = prep["cin_p"], prep["wd_p"], prep["co_p"]
    cout = prep["cout"]
    assert cin == prep["cin"]
    assert cin == cout and cin_p == co_p, "identity residual needs Cin == planes*4"
    m = n * h * w
    io_dt = prep["io_dtype"]
    cdt = prep["compute_dtype"]

    # NCHW -> NHWC, lane-pad channels, flatten spatial.  HBM-facing activations
    # travel in io_dt (bf16 on the fast path) to halve DMA traffic.
    x_nhwc = jnp.transpose(x_nchw, (0, 2, 3, 1)).astype(io_dt)
    x_nhwc = jnp.pad(x_nhwc, ((0, 0), (0, 0), (0, 0), (0, cin_p - cin)))
    x2d = x_nhwc.reshape(m, cin_p)

    tm_ = _pick_tm(m, tm)

    # Pass 1: conv1 (1x1) + partial BN1 stats.
    y1_2d, st1 = _run_conv1x1_stage(x2d, prep["w1"], apply_bn_relu=False,
                                    out_dtype=io_dt, cdt=cdt, tm=tm_)
    s1, t1 = _bn_scale_shift(st1, prep["g1"], prep["b1"], m)

    # Pass 2: BN1 + ReLU + conv2 (3x3, padding=1) + partial BN2 stats.
    y1_4d = y1_2d.reshape(n, h, w, wd_p)
    y2_4d, st2 = _run_conv3x3_stage(y1_4d, s1, t1, prep["w2"],
                                    out_dtype=io_dt, cdt=cdt)
    s2, t2 = _bn_scale_shift(st2, prep["g2"], prep["b2"], m)

    # Pass 3: BN2 + ReLU + conv3 (1x1) + partial BN3 stats.
    y2_2d = y2_4d.reshape(m, wd_p)
    y3_2d, st3 = _run_conv1x1_stage(y2_2d, prep["w3"], scale=s2, shift=t2,
                                    apply_bn_relu=True, out_dtype=io_dt,
                                    cdt=cdt, tm=tm_)
    s3, t3 = _bn_scale_shift(st3, prep["g3"], prep["b3"], m)

    # Pass 4: BN3 + identity residual + ReLU.
    out2d = _run_residual_out(y3_2d, x2d, s3, t3, out_dtype=jnp.float32, tm=tm_)

    out = out2d.reshape(n, h, w, co_p)[:, :, :, :cout]
    return jnp.transpose(out, (0, 3, 1, 2))                       # back to NCHW


# ------------------------ pure-JAX reference (check) --------------------------

def _ref_bottleneck(x, params):
    dn = ("NCHW", "OIHW", "NCHW")

    def bn_train(y, g, b):
        mean = jnp.mean(y, axis=(0, 2, 3), keepdims=True)
        var = jnp.mean((y - mean) ** 2, axis=(0, 2, 3), keepdims=True)
        return (y - mean) / jnp.sqrt(var + EPS) * g.reshape(1, -1, 1, 1) \
               + b.reshape(1, -1, 1, 1)

    out = lax.conv_general_dilated(x, params["w1"], (1, 1), "VALID",
                                   dimension_numbers=dn)
    out = jnp.maximum(bn_train(out, params["g1"], params["b1"]), 0.0)
    out = lax.conv_general_dilated(out, params["w2"], (1, 1), ((1, 1), (1, 1)),
                                   dimension_numbers=dn)
    out = jnp.maximum(bn_train(out, params["g2"], params["b2"]), 0.0)
    out = lax.conv_general_dilated(out, params["w3"], (1, 1), "VALID",
                                   dimension_numbers=dn)
    out = bn_train(out, params["g3"], params["b3"]) + x
    return jnp.maximum(out, 0.0)


# ---------------------------------- main ---------------------------------------

if __name__ == "__main__":
    key = jax.random.PRNGKey(0)
    kx, kp = jax.random.split(key)

    # Bottleneck(inplanes=16, planes=4): width=4, output channels = 16, so the
    # identity residual path is valid (stride=1, downsample=None).
    # NOTE: tiny channels waste MXU columns after lane padding; this shape is
    # for correctness, not for perf tuning.
    inplanes, planes = 16, 4
    x = jax.random.normal(kx, (2, inplanes, 16, 16), jnp.float32)    # NCHW

    params, width, cout = init_bottleneck_params(kp, inplanes, planes)
    y_ref = _ref_bottleneck(x, params)

    # 1) all-f32 path: validates tiling, two-pass BN, big-K 3x3, residual and
    #    channel padding at tight tolerance.  tm=128 exercises a multi-step grid.
    prep_f32 = prepare_bottleneck_params(params, compute_dtype=jnp.float32)
    y_f32 = jax.block_until_ready(bottleneck_forward(x, prep_f32, tm=128))
    assert y_f32.shape == y_ref.shape == (2, cout, 16, 16)
    assert jnp.allclose(y_f32, y_ref, atol=1e-3, rtol=1e-3), "f32 path mismatch"

    # 2) bf16 fast path (bf16 MXU operands + bf16 HBM intermediates; BN and the
    #    residual add stay f32 in-kernel): looser tolerance as expected.
    prep_bf16 = prepare_bottleneck_params(params, compute_dtype=jnp.bfloat16)
    y_bf16 = jax.block_until_ready(bottleneck_forward(x, prep_bf16, tm=128))
    assert y_bf16.shape == y_ref.shape
    assert jnp.allclose(y_bf16, y_ref, atol=1e-1, rtol=1e-1), "bf16 path mismatch"

    print("KERNEL_OK")
</pallas_src>

<mosaic_0001>
module attributes {stable_mosaic.version = 11 : i64} {
  func.func @_conv1x1_stage_kernel(%arg0: i32, %arg1: memref<128x128xf32, #tpu.memory_space<vmem>>, %arg2: memref<128x128xf32, #tpu.memory_space<vmem>>, %arg3: memref<128x128xf32, #tpu.memory_space<vmem>>, %arg4: memref<1x2x128xf32, #tpu.memory_space<vmem>>) attributes {dimension_semantics = [#tpu.dimension_semantics<parallel>], iteration_bounds = array<i64: 4>, scalar_prefetch = 0 : i64, scratch_operands = 0 : i64, tpu.core_type = #tpu.core_type<tc>, window_params = [{transform_indices = @transform_0, window_bounds = array<i64: 128, 128>}, {pipeline_mode = #tpu.pipeline_mode<synchronous>, transform_indices = @transform_1, window_bounds = array<i64: 128, 128>}, {transform_indices = @transform_2, window_bounds = array<i64: 128, 128>}, {transform_indices = @transform_3, window_bounds = array<i64: 1, 2, 128>}]} {
    %c0 = arith.constant 0 : index
    %c0_0 = arith.constant 0 : index
    %0 = vector.load %arg1[%c0, %c0_0] : memref<128x128xf32, #tpu.memory_space<vmem>>, vector<128x128xf32>
    %c0_1 = arith.constant 0 : index
    %c0_2 = arith.constant 0 : index
    %1 = vector.load %arg2[%c0_1, %c0_2] : memref<128x128xf32, #tpu.memory_space<vmem>>, vector<128x128xf32>
    %cst = arith.constant dense<0.000000e+00> : vector<128x128xf32>
    %2 = tpu.matmul %0, %1, %cst {dimension_numbers = #tpu.dot_dimension_numbers<[1], [0], [0], [1], [0, 0, 1, 1], [], []>} : vector<128x128xf32>, vector<128x128xf32>, vector<128x128xf32> -> vector<128x128xf32>
    %cst_3 = arith.constant dense<0.000000e+00> : vector<128xf32>
    %3 = vector.multi_reduction <add>, %2, %cst_3 [0] : vector<128x128xf32> to vector<128xf32>
    %4 = vector.shape_cast %3 : vector<128xf32> to vector<1x128xf32>
    %5 = arith.mulf %2, %2 : vector<128x128xf32>
    %cst_4 = arith.constant dense<0.000000e+00> : vector<128xf32>
    %6 = vector.multi_reduction <add>, %5, %cst_4 [0] : vector<128x128xf32> to vector<128xf32>
    %7 = vector.shape_cast %6 : vector<128xf32> to vector<1x128xf32>
    %8 = tpu.concatenate %4, %7 in 0 : vector<1x128xf32>, vector<1x128xf32> -> vector<2x128xf32>
    %9 = vector.shape_cast %8 : vector<2x128xf32> to vector<1x2x128xf32>
    %c0_5 = arith.constant 0 : index
    %c0_6 = arith.constant 0 : index
    %c0_7 = arith.constant 0 : index
    %10 = vector.load %arg4[%c0_5, %c0_6, %c0_7] : memref<1x2x128xf32, #tpu.memory_space<vmem>>, vector<1x2x128xf32>
    tpu.vector_store %arg4[%c0_5, %c0_6, %c0_7], %9 {strides = array<i32>} : memref<1x2x128xf32, #tpu.memory_space<vmem>>, vector<1x2x128xf32>,
    %c0_8 = arith.constant 0 : index
    %c0_9 = arith.constant 0 : index
    %11 = vector.load %arg3[%c0_8, %c0_9] : memref<128x128xf32, #tpu.memory_space<vmem>>, vector<128x128xf32>
    tpu.vector_store %arg3[%c0_8, %c0_9], %2 {strides = array<i32>} : memref<128x128xf32, #tpu.memory_space<vmem>>, vector<128x128xf32>,
    return
  }
  func.func @transform_0(%arg0: i32) -> (i32, i32) {
    %c0_i32 = arith.constant 0 : i32
    %c0_i32_0 = arith.constant 0 : i32
    return %arg0, %c0_i32 : i32, i32
  }
  func.func @transform_1(%arg0: i32) -> (i32, i32) {
    %c0_i32 = arith.constant 0 : i32
    %c0_i32_0 = arith.constant 0 : i32
    %c0_i32_1 = arith.constant 0 : i32
    return %c0_i32, %c0_i32_0 : i32, i32
  }
  func.func @transform_2(%arg0: i32) -> (i32, i32) {
    %c0_i32 = arith.constant 0 : i32
    %c0_i32_0 = arith.constant 0 : i32
    return %arg0, %c0_i32 : i32, i32
  }
  func.func @transform_3(%arg0: i32) -> (i32, i32, i32) {
    %c0_i32 = arith.constant 0 : i32
    %c0_i32_0 = arith.constant 0 : i32
    %c0_i32_1 = arith.constant 0 : i32
    return %arg0, %c0_i32, %c0_i32_0 : i32, i32, i32
  }
}

</mosaic_0001>

<llo_original>
// kernel: tpu_custom_call.1
$region0: #{tpu_custom_call.1}
  #allocation0 [shape = 'u32[]', space=smem, size = 0x4, offset = 0x4, fixed_abs, tag = 'smem constant byte address 0x4 - core index']
  #allocation1 [shape = 'u32[144,128]{1,0:T(1,128)}', space=vmem, size = 0x12000, scoped, tag = 'internal scratch']
  %s0 = inlined_call_operand.hbm [shape: f32[512,128], index: 0, kind: input, shape index: {}]
  %s1 = inlined_call_operand.hbm [shape: f32[128,128], index: 1, kind: input, shape index: {}]
  %s2 = inlined_call_operand.hbm [shape: f32[512,128], index: 2, kind: output, shape index: {0}]
  %s3 = inlined_call_operand.hbm [shape: f32[4,2,128], index: 3, kind: output, shape index: {1}]
  %4 = xla_tuple %s2, %s3
  %s5 = sld [smem:[#allocation0]]
  $region57: #{tpu_custom_call.1} parent=0
    _
  %s7 = ssub.s32 1, %s5
  %s8 = scalar_select 0, %s7, %s5
  $region1: #{tpu_custom_call.1} parent=0
    #allocation2 [shape = 'u8[131072]{0}', space=vmem, size = 0x20000, scoped, tag = 'input window, operand 0']
    #allocation3 [shape = 's32[2]{0}', space=sflag, size = 0x8, scoped, tag = 'scoped memory for tpu_custom_call.1']
    #allocation4 [shape = 's32[2]{0}', space=sflag, size = 0x8, scoped, tag = 'scoped memory for tpu_custom_call.1']
    #allocation5 [shape = 'u8[65536]{0}', space=vmem, size = 0x10000, scoped, tag = 'input window, operand 1, single buffered']
    #allocation6 [shape = 's32[1]{0}', space=sflag, size = 0x4, scoped, tag = 'scoped memory for tpu_custom_call.1']
    #allocation7 [shape = 'u8[131072]{0}', space=vmem, size = 0x20000, scoped, tag = 'output window, operand 0']
    #allocation8 [shape = 'u8[2048]{0}', space=vmem, size = 0x800, scoped, tag = 'output window, operand 1']
    #allocation9 [shape = 's32[2]{0}', space=sflag, size = 0x8, scoped, tag = 'scoped memory for tpu_custom_call.1']
    %9 = vsyncpa [#allocation3], 0
    %s10 = scalar_lea.sflag [#allocation3], 1
    %11 = vsyncpa %s10, 0
    %12 = vsyncpa [#allocation6], 0
    %13 = vsyncpa [#allocation4], 0
    %s14 = scalar_lea.sflag [#allocation4], 1
    %15 = vsyncpa %s14, 0
    %16 = vsyncpa [#allocation9], 0
    %s17 = scalar_lea.sflag [#allocation9], 1
    %18 = vsyncpa %s17, 0
    loop: start=0, step=1, limit=6
    $region2: #{tpu_custom_call.1} parent=1 // loop_pre_header
      _
    $region3: #{tpu_custom_call.1} parent=1 // loop_header
      %s20 = sphi 0, %s24
      %p21 = scmp.ge.s32.totalorder %s20, 6
      %s30 = sphi 0, %s32
      %s33 = sphi 0, %s30
      %s34 = sphi 0, %s33
      %s50 = sphi 0, %s34
      %s54 = sphi 0, %s54
      %s56 = sphi 0, %s54
      %s57 = sphi 0, %s56
      %s71 = sphi 0, %s57
      %s77 = sphi 0, %s79
      %s80 = sphi 0, %s77
      %s81 = sphi 0, %s80
      %s97 = sphi 0, %s81
      %s103 = sphi 0, %s105
      %s106 = sphi 0, %s103
      %s107 = sphi 0, %s106
      %s123 = sphi 0, %s107
    $region4: #{tpu_custom_call.1} parent=1 // loop_header_branch
      %23 = sbr.rel (%p21) target = $region8
    $region5: #{tpu_custom_call.1} parent=1 // loop_body
      %s25 = ssub.s32 %s20, 1
      %s26 = ssub.s32 %s20, 2
      %s27 = sadd.s32 %s20, 1
      %s28 = ssub.s32 %s20, %s27
      %p29 = scmp.eq.s32.totalorder %s28, 0
      %s31 = sadd.s32 %s30, 1
      %s32 = scalar_select %p29, %s30, %s31
      %p35 = pneg %p29
      %p36 = scmp.eq.s32.totalorder %s20, 3
      %p37 = por %p35, %p36
      %p38 = scmp.ne.s32.totalorder %s30, %s33
      %p39 = scmp.eq.s32.totalorder %s20, 0
      %p40 = por %p38, %p39
      %p41 = scmp.ne.s32.totalorder %s30, %s33
      %p42 = scmp.eq.s32.totalorder %s25, 3
      %p43 = por %p41, %p42
      %p44 = scmp.ne.s32.totalorder %s33, %s34
      %p45 = scmp.eq.s32.totalorder %s25, 0
      %p46 = por %p44, %p45
      %p47 = scmp.ne.s32.totalorder %s33, %s34
      %p48 = scmp.eq.s32.totalorder %s26, 3
      %p49 = por %p47, %p48
      %p51 = scmp.ne.s32.totalorder %s34, %s50
      %p52 = scmp.eq.s32.totalorder %s26, 0
      %p53 = por %p51, %p52
      %s55 = sadd.s32 %s54, 1
      %p58 = scmp.eq.s32.totalorder %s20, 3
      %p59 = scmp.ne.s32.totalorder %s54, %s56
      %p60 = scmp.eq.s32.totalorder %s20, 0
      %p61 = por %p59, %p60
      %p62 = scmp.ne.s32.totalorder %s54, %s56
      %p63 = scmp.eq.s32.totalorder %s25, 3
      %p64 = por %p62, %p63
      %p65 = scmp.ne.s32.totalorder %s56, %s57
      %p66 = scmp.eq.s32.totalorder %s25, 0
      %p67 = por %p65, %p66
      %p68 = scmp.ne.s32.totalorder %s56, %s57
      %p69 = scmp.eq.s32.totalorder %s26, 3
      %p70 = por %p68, %p69
      %p72 = scmp.ne.s32.totalorder %s57, %s71
      %p73 = scmp.eq.s32.totalorder %s26, 0
      %p74 = por %p72, %p73
      %s75 = ssub.s32 %s20, %s27
      %p76 = scmp.eq.s32.totalorder %s75, 0
      %s78 = sadd.s32 %s77, 1
      %s79 = scalar_select %p76, %s77, %s78
      %p82 = pneg %p76
      %p83 = scmp.eq.s32.totalorder %s20, 3
      %p84 = por %p82, %p83
      %p85 = scmp.ne.s32.totalorder %s77, %s80
      %p86 = scmp.eq.s32.totalorder %s20, 0
      %p87 = por %p85, %p86
      %p88 = scmp.ne.s32.totalorder %s77, %s80
      %p89 = scmp.eq.s32.totalorder %s25, 3
      %p90 = por %p88, %p89
      %p91 = scmp.ne.s32.totalorder %s80, %s81
      %p92 = scmp.eq.s32.totalorder %s25, 0
      %p93 = por %p91, %p92
      %p94 = scmp.ne.s32.totalorder %s80, %s81
      %p95 = scmp.eq.s32.totalorder %s26, 3
      %p96 = por %p94, %p95
      %p98 = scmp.ne.s32.totalorder %s81, %s97
      %p99 = scmp.eq.s32.totalorder %s26, 0
      %p100 = por %p98, %p99
      %s101 = ssub.s32 %s20, %s27
      %p102 = scmp.eq.s32.totalorder %s101, 0
      %s104 = sadd.s32 %s103, 1
      %s105 = scalar_select %p102, %s103, %s104
      %p108 = pneg %p102
      %p109 = scmp.eq.s32.totalorder %s20, 3
      %p110 = por %p108, %p109
      %p111 = scmp.ne.s32.totalorder %s103, %s106
      %p112 = scmp.eq.s32.totalorder %s20, 0
      %p113 = por %p111, %p112
      %p114 = scmp.ne.s32.totalorder %s103, %s106
      %p115 = scmp.eq.s32.totalorder %s25, 3
      %p116 = por %p114, %p115
      %p117 = scmp.ne.s32.totalorder %s106, %s107
      %p118 = scmp.eq.s32.totalorder %s25, 0
      %p119 = por %p117, %p118
      %p120 = scmp.ne.s32.totalorder %s106, %s107
      %p121 = scmp.eq.s32.totalorder %s26, 3
      %p122 = por %p120, %p121
      %p124 = scmp.ne.s32.totalorder %s107, %s123
      %p125 = scmp.eq.s32.totalorder %s26, 0
      %p126 = por %p124, %p125
      %p127 = scmp.le.s32.totalorder 1, %s20
      %p128 = scmp.lt.s32.totalorder %s20, 5
      %p129 = pnand %p127, %p128
      %p130 = pneg %p129
      // Predicated region
      $region9: #{tpu_custom_call.1} parent=5 // pred_check
        _
      $region10: #{tpu_custom_call.1} parent=5 // pred_check_branch
        %132 = sbr.rel (%p129) target = $region12
      $region11: #{tpu_custom_call.1} parent=5 // pred_region
        %s133 = ssub.s32 %s20, 1
        // Predicated region
        $region13: #{tpu_custom_call.1} parent=11 // pred_check
          %p134 = pneg %p67
        $region14: #{tpu_custom_call.1} parent=11 // pred_check_branch
          %136 = sbr.rel (%p134) target = $region16
        $region15: #{tpu_custom_call.1} parent=11 // pred_region
          %s138 = ssub.s32 2048, 2048
          %139 = vsyncadd [#allocation6], %s138
          %s140 = sshll.u32 [#allocation5], 4
          %s141 = int_to_ptr.vmem [resolvable:$true] %s140
          %146 = dma.hbm_to_vmem [thread:$0]  %s1, 2048, %s141, [#allocation6], 128, 128, 8
        $region16: #{tpu_custom_call.1} parent=11 // pred_fallthru
          _
      $region12: #{tpu_custom_call.1} parent=5 // pred_fallthru
        _
      %p147 = scmp.lt.s32.totalorder %s20, 4
      // Predicated region
      $region17: #{tpu_custom_call.1} parent=5 // pred_check
        %p148 = pneg %p147
      $region18: #{tpu_custom_call.1} parent=5 // pred_check_branch
        %150 = sbr.rel (%p148) target = $region20
      $region19: #{tpu_custom_call.1} parent=5 // pred_region
        // Predicated region
        $region21: #{tpu_custom_call.1} parent=19 // pred_check
          %p151 = pneg %p40
        $region22: #{tpu_custom_call.1} parent=19 // pred_check_branch
          %153 = sbr.rel (%p151) target = $region24
        $region23: #{tpu_custom_call.1} parent=19 // pred_region
          %s154 = sand.u32 %s30, 1
          %s155 = scalar_lea.sflag [#allocation3], %s154
          %s156 = sand.u32 %s30, 1
          %s157 = smul.addr %s156, 128
          %s158 = scalar_lea.vmem [#allocation2], %s157
          %s159 = smul.u32 16, %s20
          %s161 = ssub.s32 2048, 2048
          %162 = vsyncadd %s155, %s161
          %s163 = smul.addr %s159, 128
          %s164 = scalar_lea.hbm %s0, %s163
          %s165 = sshll.u32 %s158, 4
          %s166 = int_to_ptr.vmem [resolvable:$true] %s165
          %171 = dma.hbm_to_vmem [thread:$0]  %s164, 2048, %s166, %s155, 128, 128, 8
        $region24: #{tpu_custom_call.1} parent=19 // pred_fallthru
          _
      $region20: #{tpu_custom_call.1} parent=5 // pred_fallthru
        _
      %p172 = scmp.le.s32.totalorder 1, %s20
      %p173 = scmp.lt.s32.totalorder %s20, 5
      %p174 = pnand %p172, %p173
      %p175 = pneg %p174
      // Predicated region
      $region25: #{tpu_custom_call.1} parent=5 // pred_check
        _
      $region26: #{tpu_custom_call.1} parent=5 // pred_check_branch
        %177 = sbr.rel (%p174) target = $region28
      $region27: #{tpu_custom_call.1} parent=5 // pred_region
        %s178 = ssub.s32 %s20, 1
        %s179 = sand.u32 %s33, 1
        %s180 = scalar_lea.sflag [#allocation3], %s179
        %s181 = sand.u32 %s33, 1
        %s182 = smul.addr %s181, 128
        %s183 = scalar_lea.vmem [#allocation2], %s182
        // Predicated region
        $region29: #{tpu_custom_call.1} parent=27 // pred_check
          %p184 = pneg %p46
        $region30: #{tpu_custom_call.1} parent=27 // pred_check_branch
          %186 = sbr.rel (%p184) target = $region32
        $region31: #{tpu_custom_call.1} parent=27 // pred_region
          %187 = dma.done %s180, 2048
        $region32: #{tpu_custom_call.1} parent=27 // pred_fallthru
          _
        // Predicated region
        $region33: #{tpu_custom_call.1} parent=27 // pred_check
          %p188 = pneg %p67
        $region34: #{tpu_custom_call.1} parent=27 // pred_check_branch
          %190 = sbr.rel (%p188) target = $region36
        $region35: #{tpu_custom_call.1} parent=27 // pred_region
          %191 = dma.done [#allocation6], 2048
        $region36: #{tpu_custom_call.1} parent=27 // pred_fallthru
          _
        %s192 = sand.u32 %s33, 1
        %s193 = scalar_lea.sflag [#allocation3], %s192
        %s194 = sand.u32 %s33, 1
        %s195 = smul.addr %s194, 128
        %s196 = scalar_lea.vmem [#allocation2], %s195
        %p197 = pneg %p46
        %p198 = pneg %p43
        %p199 = pneg %p67
        %p200 = pneg %p64
        %p201 = pneg %p93
        %p202 = pneg %p90
        %s203 = sand.u32 %s80, 1
        %s204 = scalar_lea.sflag [#allocation4], %s203
        %s205 = sand.u32 %s80, 1
        %s206 = smul.addr %s205, 128
        %s207 = scalar_lea.vmem [#allocation7], %s206
        %p208 = pneg %p119
        %p209 = pneg %p116
        %s210 = sand.u32 %s106, 1
        %s211 = scalar_lea.sflag [#allocation9], %s210
        %s212 = sand.u32 %s106, 1
        %s213 = smul.addr %s212, 2
        %s214 = scalar_lea.vmem [#allocation8], %s213
        %s215 = smul.u32 16, %s25
        %s216 = smul.u32 16, %s25
        %v217 = vld [vmem:[%s183] sm:$0xff]
        %v218 = vld [vmem:[%s183 + $0x8] sm:$0xff]
        %v219 = vld [vmem:[%s183 + $0x10] sm:$0xff]
        %v220 = vld [vmem:[%s183 + $0x18] sm:$0xff]
        %v221 = vld [vmem:[%s183 + $0x20] sm:$0xff]
        %v222 = vld [vmem:[%s183 + $0x28] sm:$0xff]
        %v223 = vld [vmem:[%s183 + $0x30] sm:$0xff]
        %v224 = vld [vmem:[%s183 + $0x38] sm:$0xff]
        %v225 = vld [vmem:[%s183 + $0x40] sm:$0xff]
        %v226 = vld [vmem:[%s183 + $0x48] sm:$0xff]
        %v227 = vld [vmem:[%s183 + $0x50] sm:$0xff]
        %v228 = vld [vmem:[%s183 + $0x58] sm:$0xff]
        %v229 = vld [vmem:[%s183 + $0x60] sm:$0xff]
        %v230 = vld [vmem:[%s183 + $0x68] sm:$0xff]
        %v231 = vld [vmem:[%s183 + $0x70] sm:$0xff]
        %v232 = vld [vmem:[%s183 + $0x78] sm:$0xff]
        %v233 = vld [vmem:[#allocation5] sm:$0xff]
        %v234 = vld [vmem:[#allocation5 + $0x8] sm:$0xff]
        %v235 = vld [vmem:[#allocation5 + $0x10] sm:$0xff]
        %v236 = vld [vmem:[#allocation5 + $0x18] sm:$0xff]
        %v237 = vld [vmem:[#allocation5 + $0x20] sm:$0xff]
        %v238 = vld [vmem:[#allocation5 + $0x28] sm:$0xff]
        %v239 = vld [vmem:[#allocation5 + $0x30] sm:$0xff]
        %v240 = vld [vmem:[#allocation5 + $0x38] sm:$0xff]
        %v241 = vld [vmem:[#allocation5 + $0x40] sm:$0xff]
        %v242 = vld [vmem:[#allocation5 + $0x48] sm:$0xff]
        %v243 = vld [vmem:[#allocation5 + $0x50] sm:$0xff]
        %v244 = vld [vmem:[#allocation5 + $0x58] sm:$0xff]
        %v245 = vld [vmem:[#allocation5 + $0x60] sm:$0xff]
        %v246 = vld [vmem:[#allocation5 + $0x68] sm:$0xff]
        %v247 = vld [vmem:[#allocation5 + $0x70] sm:$0xff]
        %v248 = vld [vmem:[#allocation5 + $0x78] sm:$0xff]
        %249 = vmatprep.subr.mxu0 0.0
        %250 = vmatpush1.msra.mxu0 %v248
        %251 = vmatprep.subr.mxu0 0.0
        %252 = vmatpush1.msra.mxu0 %v247
        %253 = vmatprep.subr.mxu0 0.0
        %254 = vmatpush1.msra.mxu0 %v246
        %255 = vmatprep.subr.mxu0 0.0
        %256 = vmatpush1.msra.mxu0 %v245
        %257 = vmatprep.subr.mxu0 0.0
        %258 = vmatpush1.msra.mxu0 %v244
        %259 = vmatprep.subr.mxu0 0.0
        %260 = vmatpush1.msra.mxu0 %v243
        %261 = vmatprep.subr.mxu0 0.0
        %262 = vmatpush1.msra.mxu0 %v242
        %263 = vmatprep.subr.mxu0 0.0
        %264 = vmatpush1.msra.mxu0 %v241
        %265 = vmatprep.subr.mxu0 0.0
        %266 = vmatpush1.msra.mxu0 %v240
        %267 = vmatprep.subr.mxu0 0.0
        %268 = vmatpush1.msra.mxu0 %v239
        %269 = vmatprep.subr.mxu0 0.0
        %270 = vmatpush1.msra.mxu0 %v238
        %271 = vmatprep.subr.mxu0 0.0
        %272 = vmatpush1.msra.mxu0 %v237
        %273 = vmatprep.subr.mxu0 0.0
        %274 = vmatpush1.msra.mxu0 %v236
        %275 = vmatprep.subr.mxu0 0.0
        %276 = vmatpush1.msra.mxu0 %v235
        %277 = vmatprep.subr.mxu0 0.0
        %278 = vmatpush1.msra.mxu0 %v234
        %279 = vmatprep.subr.mxu0 0.0
        %280 = vmatpush1.msra.mxu0 %v233
        %281 = vmatprep.subr.mxu0 0.0
        %282 = vmatpush2.msra.mxu0 0.0
        %283 = vmatprep.subr.mxu0 0.0
        %284 = vmatpush2.msra.mxu0 0.0
        %285 = vmatprep.subr.mxu0 0.0
        %286 = vmatpush2.msra.mxu0 0.0
        %287 = vmatprep.subr.mxu0 0.0
        %288 = vmatpush2.msra.mxu0 0.0
        %289 = vmatprep.subr.mxu0 0.0
        %290 = vmatpush2.msra.mxu0 0.0
        %291 = vmatprep.subr.mxu0 0.0
        %292 = vmatpush2.msra.mxu0 0.0
        %293 = vmatprep.subr.mxu0 0.0
        %294 = vmatpush2.msra.mxu0 0.0
        %295 = vmatprep.subr.mxu0 0.0
        %296 = vmatpush2.msra.mxu0 0.0
        %297 = vmatprep.subr.mxu0 0.0
        %298 = vmatpush2.msra.mxu0 0.0
        %299 = vmatprep.subr.mxu0 0.0
        %300 = vmatpush2.msra.mxu0 0.0
        %301 = vmatprep.subr.mxu0 0.0
        %302 = vmatpush2.msra.mxu0 0.0
        %303 = vmatprep.subr.mxu0 0.0
        %304 = vmatpush2.msra.mxu0 0.0
        %305 = vmatprep.subr.mxu0 0.0
        %306 = vmatpush2.msra.mxu0 0.0
        %307 = vmatprep.subr.mxu0 0.0
        %308 = vmatpush2.msra.mxu0 0.0
        %309 = vmatprep.subr.mxu0 0.0
        %310 = vmatpush2.msra.mxu0 0.0
        %311 = vmatprep.subr.mxu0 0.0
        %312 = vmatpush2.msra.mxu0 0.0
        %313 = vmatprep.mubr.f32.mxu0 0.0
        %314 = vmatmul.mubr.f32.gmra.mxu0 %v217
        %v315 = vpop.f32.mrf.mxu0
        %v316 = vadd.f32 0.0, %v315
        %v317 = vpop.f32.mrf.mxu0
        %318 = vmatprep.mubr.f32.mxu0 0.0
        %319 = vmatmul.mubr.f32.gmra.mxu0 %v218
        %v320 = vpop.f32.mrf.mxu0
        %v321 = vadd.f32 0.0, %v320
        %v322 = vpop.f32.mrf.mxu0
        %323 = vmatprep.mubr.f32.mxu0 0.0
        %324 = vmatmul.mubr.f32.gmra.mxu0 %v219
        %v325 = vpop.f32.mrf.mxu0
        %v326 = vadd.f32 0.0, %v325
        %v327 = vpop.f32.mrf.mxu0
        %328 = vmatprep.mubr.f32.mxu0 0.0
        %329 = vmatmul.mubr.f32.gmra.mxu0 %v220
        %v330 = vpop.f32.mrf.mxu0
        %v331 = vadd.f32 0.0, %v330
        %v332 = vpop.f32.mrf.mxu0
        %333 = vmatprep.mubr.f32.mxu0 0.0
        %334 = vmatmul.mubr.f32.gmra.mxu0 %v221
        %v335 = vpop.f32.mrf.mxu0
        %v336 = vadd.f32 0.0, %v335
        %v337 = vpop.f32.mrf.mxu0
        %338 = vmatprep.mubr.f32.mxu0 0.0
        %339 = vmatmul.mubr.f32.gmra.mxu0 %v222
        %v340 = vpop.f32.mrf.mxu0
        %v341 = vadd.f32 0.0, %v340
        %v342 = vpop.f32.mrf.mxu0
        %343 = vmatprep.mubr.f32.mxu0 0.0
        %344 = vmatmul.mubr.f32.gmra.mxu0 %v223
        %v345 = vpop.f32.mrf.mxu0
        %v346 = vadd.f32 0.0, %v345
        %v347 = vpop.f32.mrf.mxu0
        %348 = vmatprep.mubr.f32.mxu0 0.0
        %349 = vmatmul.mubr.f32.gmra.mxu0 %v224
        %v350 = vpop.f32.mrf.mxu0
        %v351 = vadd.f32 0.0, %v350
        %v352 = vpop.f32.mrf.mxu0
        %353 = vmatprep.mubr.f32.mxu0 0.0
        %354 = vmatmul.mubr.f32.gmra.mxu0 %v225
        %v355 = vpop.f32.mrf.mxu0
        %v356 = vadd.f32 0.0, %v355
        %v357 = vpop.f32.mrf.mxu0
        %358 = vmatprep.mubr.f32.mxu0 0.0
        %359 = vmatmul.mubr.f32.gmra.mxu0 %v226
        %v360 = vpop.f32.mrf.mxu0
        %v361 = vadd.f32 0.0, %v360
        %v362 = vpop.f32.mrf.mxu0
        %363 = vmatprep.mubr.f32.mxu0 0.0
        %364 = vmatmul.mubr.f32.gmra.mxu0 %v227
        %v365 = vpop.f32.mrf.mxu0
        %v366 = vadd.f32 0.0, %v365
        %v367 = vpop.f32.mrf.mxu0
        %368 = vmatprep.mubr.f32.mxu0 0.0
        %369 = vmatmul.mubr.f32.gmra.mxu0 %v228
        %v370 = vpop.f32.mrf.mxu0
        %v371 = vadd.f32 0.0, %v370
        %v372 = vpop.f32.mrf.mxu0
        %373 = vmatprep.mubr.f32.mxu0 0.0
        %374 = vmatmul.mubr.f32.gmra.mxu0 %v229
        %v375 = vpop.f32.mrf.mxu0
        %v376 = vadd.f32 0.0, %v375
        %v377 = vpop.f32.mrf.mxu0
        %378 = vmatprep.mubr.f32.mxu0 0.0
        %379 = vmatmul.mubr.f32.gmra.mxu0 %v230
        %v380 = vpop.f32.mrf.mxu0
        %v381 = vadd.f32 0.0, %v380
        %v382 = vpop.f32.mrf.mxu0
        %383 = vmatprep.mubr.f32.mxu0 0.0
        %384 = vmatmul.mubr.f32.gmra.mxu0 %v231
        %v385 = vpop.f32.mrf.mxu0
        %v386 = vadd.f32 0.0, %v385
        %v387 = vpop.f32.mrf.mxu0
        %388 = vmatprep.mubr.f32.mxu0 0.0
        %389 = vmatmul.mubr.f32.gmra.mxu0 %v232
        %v390 = vpop.f32.mrf.mxu0
        %v391 = vadd.f32 0.0, %v390
        %v392 = vpop.f32.mrf.mxu0
        %393 = vdwg.mxu0
        %v394 = vadd.f32 %v316, %v321
        %v395 = vadd.f32 %v394, %v326
        %v396 = vadd.f32 %v395, %v331
        %v397 = vadd.f32 %v396, %v336
        %v398 = vadd.f32 %v397, %v341
        %v399 = vadd.f32 %v398, %v346
        %v400 = vadd.f32 %v399, %v351
        %v401 = vadd.f32 %v400, %v356
        %v402 = vadd.f32 %v401, %v361
        %v403 = vadd.f32 %v402, %v366
        %v404 = vadd.f32 %v403, %v371
        %v405 = vadd.f32 %v404, %v376
        %v406 = vadd.f32 %v405, %v381
        %v407 = vadd.f32 %v406, %v386
        %v408 = vadd.f32 %v407, %v391
        %v409 = vrot.slane %v408, 4
        %v410 = vadd.f32 %v408, %v409
        %v411 = vrot.slane %v410, 2
        %v412 = vadd.f32 %v410, %v411
        %v413 = vrot.slane %v412, 1
        %v414 = vadd.f32 %v412, %v413
        %v415 = vmul.f32 %v316, %v316
        %v416 = vmul.f32 %v321, %v321
        %v417 = vmul.f32 %v326, %v326
        %v418 = vmul.f32 %v331, %v331
        %v419 = vmul.f32 %v336, %v336
        %v420 = vmul.f32 %v341, %v341
        %v421 = vmul.f32 %v346, %v346
        %v422 = vmul.f32 %v351, %v351
        %v423 = vmul.f32 %v356, %v356
        %v424 = vmul.f32 %v361, %v361
        %v425 = vmul.f32 %v366, %v366
        %v426 = vmul.f32 %v371, %v371
        %v427 = vmul.f32 %v376, %v376
        %v428 = vmul.f32 %v381, %v381
        %v429 = vmul.f32 %v386, %v386
        %v430 = vmul.f32 %v391, %v391
        %v431 = vadd.f32 %v415, %v416
        %v432 = vadd.f32 %v431, %v417
        %v433 = vadd.f32 %v432, %v418
        %v434 = vadd.f32 %v433, %v419
        %v435 = vadd.f32 %v434, %v420
        %v436 = vadd.f32 %v435, %v421
        %v437 = vadd.f32 %v436, %v422
        %v438 = vadd.f32 %v437, %v423
        %v439 = vadd.f32 %v438, %v424
        %v440 = vadd.f32 %v439, %v425
        %v441 = vadd.f32 %v440, %v426
        %v442 = vadd.f32 %v441, %v427
        %v443 = vadd.f32 %v442, %v428
        %v444 = vadd.f32 %v443, %v429
        %v445 = vadd.f32 %v444, %v430
        %v446 = vrot.slane %v445, 4
        %v447 = vadd.f32 %v445, %v446
        %v448 = vrot.slane %v447, 2
        %v449 = vadd.f32 %v447, %v448
        %v450 = vrot.slane %v449, 1
        %v451 = vadd.f32 %v449, %v450
        %vm452 = vcmask 1040384
        %v453 = vsel %vm452, %v414, %v451
        %454 = vst [vmem:[%s214] sm:$0x3] %v453
        %455 = vst [vmem:[%s207] sm:$0xff] %v316
        %456 = vst [vmem:[%s207 + $0x8] sm:$0xff] %v321
        %457 = vst [vmem:[%s207 + $0x10] sm:$0xff] %v326
        %458 = vst [vmem:[%s207 + $0x18] sm:$0xff] %v331
        %459 = vst [vmem:[%s207 + $0x20] sm:$0xff] %v336
        %460 = vst [vmem:[%s207 + $0x28] sm:$0xff] %v341
        %461 = vst [vmem:[%s207 + $0x30] sm:$0xff] %v346
        %462 = vst [vmem:[%s207 + $0x38] sm:$0xff] %v351
        %463 = vst [vmem:[%s207 + $0x40] sm:$0xff] %v356
        %464 = vst [vmem:[%s207 + $0x48] sm:$0xff] %v361
        %465 = vst [vmem:[%s207 + $0x50] sm:$0xff] %v366
        %466 = vst [vmem:[%s207 + $0x58] sm:$0xff] %v371
        %467 = vst [vmem:[%s207 + $0x60] sm:$0xff] %v376
        %468 = vst [vmem:[%s207 + $0x68] sm:$0xff] %v381
        %469 = vst [vmem:[%s207 + $0x70] sm:$0xff] %v386
        %470 = vst [vmem:[%s207 + $0x78] sm:$0xff] %v391
        %s471 = sand.u32 %s80, 1
        %s472 = scalar_lea.sflag [#allocation4], %s471
        %s473 = sand.u32 %s80, 1
        %s474 = smul.addr %s473, 128
        %s475 = scalar_lea.vmem [#allocation7], %s474
        %s476 = sand.u32 %s106, 1
        %s477 = scalar_lea.sflag [#allocation9], %s476
        %s478 = sand.u32 %s106, 1
        %s479 = smul.addr %s478, 2
        %s480 = scalar_lea.vmem [#allocation8], %s479
        // Predicated region
        $region37: #{tpu_custom_call.1} parent=27 // pred_check
          %p481 = pneg %p90
        $region38: #{tpu_custom_call.1} parent=27 // pred_check_branch
          %483 = sbr.rel (%p481) target = $region40
        $region39: #{tpu_custom_call.1} parent=27 // pred_region
          %s484 = smul.u32 16, %s25
          %s486 = ssub.s32 2048, 2048
          %487 = vsyncadd %s472, %s486
          %s488 = smul.addr %s484, 128
          %s489 = scalar_lea.hbm %s2, %s488
          %s490 = sshll.u32 %s475, 4
          %s491 = int_to_ptr.vmem [resolvable:$true] %s490
          %496 = dma.vmem_to_hbm [thread:$0]  %s491, 2048, %s489, %s472, 128, 128, 8
        $region40: #{tpu_custom_call.1} parent=27 // pred_fallthru
          _
        // Predicated region
        $region41: #{tpu_custom_call.1} parent=27 // pred_check
          %p497 = pneg %p116
        $region42: #{tpu_custom_call.1} parent=27 // pred_check_branch
          %499 = sbr.rel (%p497) target = $region44
        $region43: #{tpu_custom_call.1} parent=27 // pred_region
          %s501 = ssub.s32 32, 32
          %502 = vsyncadd %s477, %s501
          %s503 = smul.addr %s25, 32
          %s504 = scalar_lea.hbm %s3, %s503
          %s506 = sshll.u32 %s480, 4
          %s507 = int_to_ptr.vmem [resolvable:$true] %s506
          %509 = dma.vmem_to_hbm [thread:$0]  %s507, 32, %s504, %s477
        $region44: #{tpu_custom_call.1} parent=27 // pred_fallthru
          _
      $region28: #{tpu_custom_call.1} parent=5 // pred_fallthru
        _
      %p510 = scmp.le.s32.totalorder 2, %s20
      // Predicated region
      $region45: #{tpu_custom_call.1} parent=5 // pred_check
        %p511 = pneg %p510
      $region46: #{tpu_custom_call.1} parent=5 // pred_check_branch
        %513 = sbr.rel (%p511) target = $region48
      $region47: #{tpu_custom_call.1} parent=5 // pred_region
        %s514 = ssub.s32 %s20, 2
        // Predicated region
        $region49: #{tpu_custom_call.1} parent=47 // pred_check
          %p515 = pneg %p96
        $region50: #{tpu_custom_call.1} parent=47 // pred_check_branch
          %517 = sbr.rel (%p515) target = $region52
        $region51: #{tpu_custom_call.1} parent=47 // pred_region
          %s518 = sand.u32 %s81, 1
          %s519 = scalar_lea.sflag [#allocation4], %s518
          %s520 = sand.u32 %s81, 1
          %s521 = smul.addr %s520, 128
          %s522 = scalar_lea.vmem [#allocation7], %s521
          %523 = dma.done %s519, 2048
        $region52: #{tpu_custom_call.1} parent=47 // pred_fallthru
          _
        // Predicated region
        $region53: #{tpu_custom_call.1} parent=47 // pred_check
          %p524 = pneg %p122
        $region54: #{tpu_custom_call.1} parent=47 // pred_check_branch
          %526 = sbr.rel (%p524) target = $region56
        $region55: #{tpu_custom_call.1} parent=47 // pred_region
          %s527 = sand.u32 %s107, 1
          %s528 = scalar_lea.sflag [#allocation9], %s527
          %s529 = sand.u32 %s107, 1
          %s530 = smul.addr %s529, 2
          %s531 = scalar_lea.vmem [#allocation8], %s530
          %532 = dma.done %s528, 32
        $region56: #{tpu_custom_call.1} parent=47 // pred_fallthru
          _
      $region48: #{tpu_custom_call.1} parent=5 // pred_fallthru
        _
    $region6: #{tpu_custom_call.1} parent=1 // loop_footer
      %s24 = sadd.s32 1, %s20
    $region7: #{tpu_custom_call.1} parent=1 // loop_footer_branch
      %19 = sbr.rel target = $region3
    $region8: #{tpu_custom_call.1} parent=1 // loop_exit
      _
    %533 = vsyncpa [#allocation3], 1
    %s534 = scalar_lea.sflag [#allocation3], 1
    %535 = vsyncpa %s534, 1
    %536 = vsyncpa [#allocation6], 1
    %537 = vsyncpa [#allocation4], 1
    %s538 = scalar_lea.sflag [#allocation4], 1
    %539 = vsyncpa %s538, 1
    %540 = vsyncpa [#allocation9], 1
    %s541 = scalar_lea.sflag [#allocation9], 1
    %542 = vsyncpa %s541, 1

</llo_original>
